<compile_context>
chip_gen: v7x
topology: tpu7x:2x2x1
jax: 0.10.0
libtpu: 0.0.40
codegen_flags: <defaults>
</compile_context>

<pallas_src>
import jax
import jax.numpy as jnp
from jax.experimental import pallas as pl
from jax.experimental.pallas import tpu as pltpu


def _round_up(x, m):
    return ((x + m - 1) // m) * m


# ---------------- Pallas kernels (hot path) ----------------

def _conv_matmul_bias_relu_kernel(x_ref, w_ref, b_ref, o_ref, acc_ref):
    # x: (TM, TK) bf16 im2col patches; w: (TK, TN) bf16 weight with BN scale folded in;
    # b: (1, TN) f32 folded BN bias.  K is the trailing reduction grid axis; the f32
    # accumulator lives in VMEM scratch and the output is written once on the last k.
    @pl.when(pl.program_id(2) == 0)
    def _():
        acc_ref[...] = jnp.zeros_like(acc_ref)

    acc_ref[...] += jnp.dot(x_ref[...], w_ref[...],
                            preferred_element_type=jnp.float32)

    @pl.when(pl.program_id(2) == pl.num_programs(2) - 1)
    def _():
        o_ref[...] = jnp.maximum(acc_ref[...] + b_ref[...], 0.0).astype(o_ref.dtype)


def _maxpool_kernel(p_ref, o_ref):
    # p: (9, TM, Cp) — the 9 window taps with channels lane-dense.  Pure VPU
    # elementwise max tree, (TM, Cp) lane-dense output.
    r = jnp.maximum(p_ref[0], p_ref[1])
    for t in range(2, 9):
        r = jnp.maximum(r, p_ref[t])
    o_ref[...] = r


# ---------------- conv (im2col glue + fused tiled Pallas matmul) ----------------

def conv_bn_relu(x_nhwc, weight_oihw, gamma, beta, mean, var, *, stride, padding,
                 eps=1e-3):
    N, H, W, Cin = x_nhwc.shape
    Cout, _, KH, KW = weight_oihw.shape
    if padding:
        x_nhwc = jnp.pad(x_nhwc,
                         ((0, 0), (padding, padding), (padding, padding), (0, 0)))
        H += 2 * padding
        W += 2 * padding
    OH = (H - KH) // stride + 1
    OW = (W - KW) // stride + 1

    # im2col (plain-JAX glue: strided slicing only).
    # TODO(synk): drive the KH*KW taps from the grid / index_map over the NHWC input
    # to avoid materializing the im2col matrix in HBM.
    cols = []
    for kh in range(KH):
        for kw in range(KW):
            cols.append(
                x_nhwc[:, kh:kh + stride * (OH - 1) + 1:stride,
                       kw:kw + stride * (OW - 1) + 1:stride, :])
    patches = jnp.stack(cols, axis=3).reshape(N * OH * OW, KH * KW * Cin)

    # PyTorch OIHW weight -> (KH*KW*Cin, Cout); fold BN (eval mode) scale into the
    # weight so the kernel epilogue is just bias + ReLU.
    scale = gamma / jnp.sqrt(var + eps)
    bias = beta - mean * scale
    w_mat = jnp.transpose(weight_oihw, (2, 3, 1, 0)).reshape(KH * KW * Cin, Cout)
    w_mat = w_mat * scale[None, :]

    M, Kd = patches.shape

    # ---- tile sizes: MXU-aligned, bounded VMEM, >=2 parallel steps when possible ----
    M_pad = _round_up(M, 128)
    TM = 256 if (M_pad >= 256 and M_pad % 256 == 0) else 128
    TN = 128
    N_pad = _round_up(Cout, TN)
    K_pad = _round_up(Kd, 128)
    if K_pad > 1024:            # deep reductions (e.g. 3x3x288): tile K, accumulate
        TK = 512
        K_pad = _round_up(K_pad, TK)
    else:
        TK = K_pad
    gm, gn, gk = M_pad // TM, N_pad // TN, K_pad // TK

    # bf16 MXU inputs (f32 accumulation stays inside the kernel); bias stays f32.
    patches_p = jnp.pad(patches, ((0, M_pad - M), (0, K_pad - Kd))).astype(jnp.bfloat16)
    w_p = jnp.pad(w_mat, ((0, K_pad - Kd), (0, N_pad - Cout))).astype(jnp.bfloat16)
    b_p = jnp.pad(bias, (0, N_pad - Cout)).reshape(1, N_pad).astype(jnp.float32)

    cost = pl.CostEstimate(
        flops=2 * M_pad * K_pad * N_pad,
        transcendentals=0,
        bytes_accessed=(M_pad * K_pad * 2 * gn + K_pad * N_pad * 2 * gm
                        + M_pad * N_pad * 4 + N_pad * 4),
    )

    out = pl.pallas_call(
        _conv_matmul_bias_relu_kernel,
        out_shape=jax.ShapeDtypeStruct((M_pad, N_pad), jnp.float32),
        grid_spec=pltpu.PrefetchScalarGridSpec(
            num_scalar_prefetch=0,
            grid=(gm, gn, gk),
            in_specs=[
                pl.BlockSpec((TM, TK), lambda i, j, k: (i, k)),
                pl.BlockSpec((TK, TN), lambda i, j, k: (k, j)),
                pl.BlockSpec((1, TN), lambda i, j, k: (0, j)),
            ],
            out_specs=pl.BlockSpec((TM, TN), lambda i, j, k: (i, j)),
            scratch_shapes=[pltpu.VMEM((TM, TN), jnp.float32)],
        ),
        compiler_params=pltpu.CompilerParams(
            dimension_semantics=("parallel", "parallel", "arbitrary")),
        cost_estimate=cost,
    )(patches_p, w_p, b_p)

    return out[:M, :Cout].reshape(N, OH, OW, Cout)


# ---------------- max pool 3x3 / stride 2 (valid) ----------------

def maxpool3x3_s2(x_nhwc):
    N, H, W, C = x_nhwc.shape
    OH = (H - 3) // 2 + 1
    OW = (W - 3) // 2 + 1
    cols = []
    for kh in range(3):
        for kw in range(3):
            cols.append(x_nhwc[:, kh:kh + 2 * (OH - 1) + 1:2,
                               kw:kw + 2 * (OW - 1) + 1:2, :])
    patches = jnp.stack(cols, axis=0).reshape(9, N * OH * OW, C)  # (9, M, C)

    M = N * OH * OW
    Cp = _round_up(C, 128)
    M8 = _round_up(M, 8)
    TM = min(512, M8)
    M_pad = _round_up(M, TM)

    patches_p = jnp.pad(patches, ((0, 0), (0, M_pad - M), (0, Cp - C)),
                        constant_values=-jnp.inf).astype(jnp.float32)

    out = pl.pallas_call(
        _maxpool_kernel,
        out_shape=jax.ShapeDtypeStruct((M_pad, Cp), jnp.float32),
        grid_spec=pltpu.PrefetchScalarGridSpec(
            num_scalar_prefetch=0,
            grid=(M_pad // TM,),
            in_specs=[pl.BlockSpec((9, TM, Cp), lambda i: (0, i, 0))],
            out_specs=pl.BlockSpec((TM, Cp), lambda i: (i, 0)),
        ),
        compiler_params=pltpu.CompilerParams(dimension_semantics=("parallel",)),
    )(patches_p)

    return out[:M, :C].reshape(N, OH, OW, C)


# ---------------- InceptionB forward ----------------

def inception_b_forward(x_nchw, params):
    x = jnp.transpose(x_nchw, (0, 2, 3, 1)).astype(jnp.float32)  # NCHW -> NHWC

    # Branch 0: 3x3 conv, stride 2
    b0 = conv_bn_relu(x, *params["branch3x3"], stride=2, padding=0)

    # Branch 1: 1x1 -> 3x3 pad 1 -> 3x3 stride 2
    b1 = conv_bn_relu(x, *params["dbl1"], stride=1, padding=0)
    b1 = conv_bn_relu(b1, *params["dbl2"], stride=1, padding=1)
    b1 = conv_bn_relu(b1, *params["dbl3"], stride=2, padding=0)

    # Branch 2: max_pool2d(x, kernel_size=3, stride=2)
    bp = maxpool3x3_s2(x)

    out = jnp.concatenate([b0, b1, bp], axis=-1)   # channel concat (== torch.cat(..., 1))
    return jnp.transpose(out, (0, 3, 1, 2))        # NHWC -> NCHW


# ---------------- deterministic parameter init ----------------

def init_params(key, in_channels):
    # BN is used in eval-mode (running statistics); parameters folded into scale/bias.
    def conv_bn(k, cin, cout, ksz):
        kw, kg, kb, km, kv = jax.random.split(k, 5)
        weight = jax.random.normal(kw, (cout, cin, ksz, ksz), jnp.float32) / jnp.sqrt(
            float(cin * ksz * ksz))
        gamma = 1.0 + 0.1 * jax.random.normal(kg, (cout,), jnp.float32)
        beta = 0.1 * jax.random.normal(kb, (cout,), jnp.float32)
        mean = 0.1 * jax.random.normal(km, (cout,), jnp.float32)
        var = jnp.abs(jax.random.normal(kv, (cout,), jnp.float32)) + 0.5
        return (weight, gamma, beta, mean, var)

    k0, k1, k2, k3 = jax.random.split(key, 4)
    return {
        "branch3x3": conv_bn(k0, in_channels, 384, 3),
        "dbl1": conv_bn(k1, in_channels, 64, 1),
        "dbl2": conv_bn(k2, 64, 96, 3),
        "dbl3": conv_bn(k3, 96, 96, 3),
    }


if __name__ == "__main__":
    key = jax.random.PRNGKey(0)
    kx, kp = jax.random.split(key)
    N, C, H, W = 2, 4, 16, 16
    x = jax.random.normal(kx, (N, C, H, W), jnp.float32)
    params = init_params(kp, C)

    out = inception_b_forward(x, params)
    out = jax.block_until_ready(out)

    expected = (N, 384 + 96 + C, (H - 3) // 2 + 1, (W - 3) // 2 + 1)
    assert out.shape == expected, (out.shape, expected)
    print("KERNEL_OK")
</pallas_src>

<mosaic_0001>
module attributes {stable_mosaic.version = 11 : i64} {
  func.func @_conv_matmul_bias_relu_kernel(%arg0: i32, %arg1: i32, %arg2: i32, %arg3: memref<128x128xbf16, #tpu.memory_space<vmem>>, %arg4: memref<128x128xbf16, #tpu.memory_space<vmem>>, %arg5: memref<1x128xf32, #tpu.memory_space<vmem>>, %arg6: memref<128x128xf32, #tpu.memory_space<vmem>>, %arg7: memref<128x128xf32, #tpu.memory_space<vmem>>) attributes {dimension_semantics = [#tpu.dimension_semantics<parallel>, #tpu.dimension_semantics<parallel>, #tpu.dimension_semantics<arbitrary>], iteration_bounds = array<i64: 1, 3, 1>, scalar_prefetch = 0 : i64, scratch_operands = 1 : i64, tpu.core_type = #tpu.core_type<tc>, window_params = [{transform_indices = @transform_0, window_bounds = array<i64: 128, 128>}, {transform_indices = @transform_1, window_bounds = array<i64: 128, 128>}, {transform_indices = @transform_2, window_bounds = array<i64: 1, 128>}, {transform_indices = @transform_3, window_bounds = array<i64: 128, 128>}]} {
    %c0_i32 = arith.constant 0 : i32
    %0 = arith.cmpi eq, %arg2, %c0_i32 : i32
    %1 = arith.extui %0 : i1 to i32
    %c0_i32_0 = arith.constant 0 : i32
    %2 = arith.cmpi ne, %1, %c0_i32_0 : i32
    scf.if %2 {
      %cst_10 = arith.constant 0.000000e+00 : f32
      %12 = vector.broadcast %cst_10 : f32 to vector<128x128xf32>
      %c0_11 = arith.constant 0 : index
      %c0_12 = arith.constant 0 : index
      %13 = vector.load %arg7[%c0_11, %c0_12] : memref<128x128xf32, #tpu.memory_space<vmem>>, vector<128x128xf32>
      tpu.vector_store %arg7[%c0_11, %c0_12], %12 {strides = array<i32>} : memref<128x128xf32, #tpu.memory_space<vmem>>, vector<128x128xf32>,
    } else {
    }
    %c0 = arith.constant 0 : index
    %c0_1 = arith.constant 0 : index
    %3 = vector.load %arg7[%c0, %c0_1] : memref<128x128xf32, #tpu.memory_space<vmem>>, vector<128x128xf32>
    %c0_2 = arith.constant 0 : index
    %c0_3 = arith.constant 0 : index
    %4 = vector.load %arg3[%c0_2, %c0_3] : memref<128x128xbf16, #tpu.memory_space<vmem>>, vector<128x128xbf16>
    %c0_4 = arith.constant 0 : index
    %c0_5 = arith.constant 0 : index
    %5 = vector.load %arg4[%c0_4, %c0_5] : memref<128x128xbf16, #tpu.memory_space<vmem>>, vector<128x128xbf16>
    %cst = arith.constant dense<0.000000e+00> : vector<128x128xf32>
    %6 = tpu.matmul %4, %5, %cst {dimension_numbers = #tpu.dot_dimension_numbers<[1], [0], [0], [1], [0, 0, 1, 1], [], []>} : vector<128x128xbf16>, vector<128x128xbf16>, vector<128x128xf32> -> vector<128x128xf32>
    %7 = arith.addf %3, %6 : vector<128x128xf32>
    %c0_6 = arith.constant 0 : index
    %c0_7 = arith.constant 0 : index
    %8 = vector.load %arg7[%c0_6, %c0_7] : memref<128x128xf32, #tpu.memory_space<vmem>>, vector<128x128xf32>
    tpu.vector_store %arg7[%c0_6, %c0_7], %7 {strides = array<i32>} : memref<128x128xf32, #tpu.memory_space<vmem>>, vector<128x128xf32>,
    %c0_i32_8 = arith.constant 0 : i32
    %9 = arith.cmpi eq, %arg2, %c0_i32_8 : i32
    %10 = arith.extui %9 : i1 to i32
    %c0_i32_9 = arith.constant 0 : i32
    %11 = arith.cmpi ne, %10, %c0_i32_9 : i32
    scf.if %11 {
      %c0_10 = arith.constant 0 : index
      %c0_11 = arith.constant 0 : index
      %12 = vector.load %arg7[%c0_10, %c0_11] : memref<128x128xf32, #tpu.memory_space<vmem>>, vector<128x128xf32>
      %c0_12 = arith.constant 0 : index
      %c0_13 = arith.constant 0 : index
      %13 = vector.load %arg5[%c0_12, %c0_13] : memref<1x128xf32, #tpu.memory_space<vmem>>, vector<1x128xf32>
      %14 = vector.broadcast %13 : vector<1x128xf32> to vector<128x128xf32>
      %15 = arith.addf %12, %14 : vector<128x128xf32>
      %cst_14 = arith.constant 0.000000e+00 : f32
      %16 = vector.broadcast %cst_14 : f32 to vector<128x128xf32>
      %17 = arith.maximumf %15, %16 : vector<128x128xf32>
      %c0_15 = arith.constant 0 : index
      %c0_16 = arith.constant 0 : index
      %18 = vector.load %arg6[%c0_15, %c0_16] : memref<128x128xf32, #tpu.memory_space<vmem>>, vector<128x128xf32>
      tpu.vector_store %arg6[%c0_15, %c0_16], %17 {strides = array<i32>} : memref<128x128xf32, #tpu.memory_space<vmem>>, vector<128x128xf32>,
    } else {
    }
    return
  }
  func.func @transform_0(%arg0: i32, %arg1: i32, %arg2: i32) -> (i32, i32) {
    %c0_i32 = arith.constant 0 : i32
    return %arg0, %arg2 : i32, i32
  }
  func.func @transform_1(%arg0: i32, %arg1: i32, %arg2: i32) -> (i32, i32) {
    %c0_i32 = arith.constant 0 : i32
    return %arg2, %arg1 : i32, i32
  }
  func.func @transform_2(%arg0: i32, %arg1: i32, %arg2: i32) -> (i32, i32) {
    %c0_i32 = arith.constant 0 : i32
    %c0_i32_0 = arith.constant 0 : i32
    return %c0_i32, %arg1 : i32, i32
  }
  func.func @transform_3(%arg0: i32, %arg1: i32, %arg2: i32) -> (i32, i32) {
    %c0_i32 = arith.constant 0 : i32
    return %arg0, %arg1 : i32, i32
  }
}

</mosaic_0001>

<llo_original>
// kernel: tpu_custom_call.1
$region0: #{tpu_custom_call.1}
  #allocation0 [shape = 'u32[]', space=smem, size = 0x4, offset = 0x4, fixed_abs, tag = 'smem constant byte address 0x4 - core index']
  #allocation1 [shape = 'u32[144,128]{1,0:T(1,128)}', space=vmem, size = 0x12000, scoped, tag = 'internal scratch']
  #allocation2 [shape = 'f32[128,128]{1,0:T(8,128)}', space=vmem, size = 0x10000, scoped, tag = 'scratch operand']
  %s0 = inlined_call_operand.hbm [shape: bf16[128,128], index: 0, kind: input, shape index: {}]
  %s1 = inlined_call_operand.hbm [shape: bf16[128,384], index: 1, kind: input, shape index: {}]
  %s2 = inlined_call_operand.vmem [shape: f32[1,384], index: 2, kind: input, shape index: {}]
  %s3 = inlined_call_operand.hbm [shape: f32[128,384], index: 3, kind: output, shape index: {}]
  %s4 = sld [smem:[#allocation0]]
  $region61: #{tpu_custom_call.1} parent=0
    _
  %s6 = ssub.s32 1, %s4
  %s7 = scalar_select 0, %s6, %s4
  $region1: #{tpu_custom_call.1} parent=0
    #allocation3 [shape = 'u8[32768]{0}', space=vmem, size = 0x8000, scoped, tag = 'input window, operand 0, single buffered']
    #allocation4 [shape = 's32[2]{0}', space=sflag, size = 0x8, scoped, tag = 'scoped memory for tpu_custom_call.1']
    #allocation5 [shape = 's32[2]{0}', space=sflag, size = 0x8, scoped, tag = 'scoped memory for tpu_custom_call.1']
    #allocation6 [shape = 'u8[65536]{0}', space=vmem, size = 0x10000, scoped, tag = 'input window, operand 1']
    #allocation7 [shape = 's32[2]{0}', space=sflag, size = 0x8, scoped, tag = 'scoped memory for tpu_custom_call.1']
    #allocation8 [shape = 'u8[131072]{0}', space=vmem, size = 0x20000, scoped, tag = 'output window, operand 0']
    %8 = vsyncpa [#allocation4], 0
    %9 = vsyncpa [#allocation7], 0
    %s10 = scalar_lea.sflag [#allocation7], 1
    %11 = vsyncpa %s10, 0
    %12 = vsyncpa [#allocation5], 0
    %s13 = scalar_lea.sflag [#allocation5], 1
    %14 = vsyncpa %s13, 0
    loop: start=0, step=1, limit=5
    $region2: #{tpu_custom_call.1} parent=1 // loop_pre_header
      _
    $region3: #{tpu_custom_call.1} parent=1 // loop_header
      %s16 = sphi 0, %s20
      %p17 = scmp.ge.s32.totalorder %s16, 5
      %s23 = sphi 0, %s42
      %s24 = sphi 0, %s38
      %s25 = sphi 0, %s34
      %s26 = sphi 0, %s23
      %s27 = sphi 0, %s24
      %s28 = sphi 0, %s25
      %s29 = sphi 0, %s26
      %s30 = sphi 0, %s27
      %s31 = sphi 0, %s28
      %s47 = sphi 0, %s49
      %s50 = sphi 0, %s47
      %s51 = sphi 0, %s50
      %s67 = sphi 0, %s51
      %s75 = sphi 0, %s77
      %s78 = sphi 0, %s75
      %s79 = sphi 0, %s78
      %s95 = sphi 0, %s79
      %s101 = sphi 0, %s103
      %s104 = sphi 0, %s101
      %s105 = sphi 0, %s104
      %s121 = sphi 0, %s105
      %s129 = sphi 0, %s131
      %s132 = sphi 0, %s129
      %s133 = sphi 0, %s132
      %s149 = sphi 0, %s133
    $region4: #{tpu_custom_call.1} parent=1 // loop_header_branch
      %19 = sbr.rel (%p17) target = $region8
    $region5: #{tpu_custom_call.1} parent=1 // loop_body
      %s21 = ssub.s32 %s16, 1
      %s22 = ssub.s32 %s16, 2
      %s32 = sadd.s32 1, %s25
      %p33 = scmp.ge.s32.totalorder %s32, 1
      %s34 = scalar_select %p33, 0, %s32
      %s35 = sadd.s32 1, %s24
      %s36 = scalar_select %p33, %s35, %s24
      %p37 = scmp.ge.s32.totalorder %s36, 3
      %s38 = scalar_select %p37, 0, %s36
      %s39 = sadd.s32 1, %s23
      %s40 = scalar_select %p37, %s39, %s23
      %p41 = scmp.ge.s32.totalorder %s40, 1
      %s42 = scalar_select %p41, 0, %s40
      %s43 = ssub.s32 %s23, %s42
      %s44 = ssub.s32 %s25, %s34
      %s45 = sor.u32 %s43, %s44
      %p46 = scmp.eq.s32.totalorder %s45, 0
      %s48 = sadd.s32 %s47, 1
      %s49 = scalar_select %p46, %s47, %s48
      %p52 = pneg %p46
      %p53 = scmp.eq.s32.totalorder %s16, 2
      %p54 = por %p52, %p53
      %p55 = scmp.ne.s32.totalorder %s47, %s50
      %p56 = scmp.eq.s32.totalorder %s16, 0
      %p57 = por %p55, %p56
      %p58 = scmp.ne.s32.totalorder %s47, %s50
      %p59 = scmp.eq.s32.totalorder %s21, 2
      %p60 = por %p58, %p59
      %p61 = scmp.ne.s32.totalorder %s50, %s51
      %p62 = scmp.eq.s32.totalorder %s21, 0
      %p63 = por %p61, %p62
      %p64 = scmp.ne.s32.totalorder %s50, %s51
      %p65 = scmp.eq.s32.totalorder %s22, 2
      %p66 = por %p64, %p65
      %p68 = scmp.ne.s32.totalorder %s51, %s67
      %p69 = scmp.eq.s32.totalorder %s22, 0
      %p70 = por %p68, %p69
      %s71 = ssub.s32 %s25, %s34
      %s72 = ssub.s32 %s24, %s38
      %s73 = sor.u32 %s71, %s72
      %p74 = scmp.eq.s32.totalorder %s73, 0
      %s76 = sadd.s32 %s75, 1
      %s77 = scalar_select %p74, %s75, %s76
      %p80 = pneg %p74
      %p81 = scmp.eq.s32.totalorder %s16, 2
      %p82 = por %p80, %p81
      %p83 = scmp.ne.s32.totalorder %s75, %s78
      %p84 = scmp.eq.s32.totalorder %s16, 0
      %p85 = por %p83, %p84
      %p86 = scmp.ne.s32.totalorder %s75, %s78
      %p87 = scmp.eq.s32.totalorder %s21, 2
      %p88 = por %p86, %p87
      %p89 = scmp.ne.s32.totalorder %s78, %s79
      %p90 = scmp.eq.s32.totalorder %s21, 0
      %p91 = por %p89, %p90
      %p92 = scmp.ne.s32.totalorder %s78, %s79
      %p93 = scmp.eq.s32.totalorder %s22, 2
      %p94 = por %p92, %p93
      %p96 = scmp.ne.s32.totalorder %s79, %s95
      %p97 = scmp.eq.s32.totalorder %s22, 0
      %p98 = por %p96, %p97
      %s99 = ssub.s32 %s24, %s38
      %p100 = scmp.eq.s32.totalorder %s99, 0
      %s102 = sadd.s32 %s101, 1
      %s103 = scalar_select %p100, %s101, %s102
      %p106 = pneg %p100
      %p107 = scmp.eq.s32.totalorder %s16, 2
      %p108 = por %p106, %p107
      %p109 = scmp.ne.s32.totalorder %s101, %s104
      %p110 = scmp.eq.s32.totalorder %s16, 0
      %p111 = por %p109, %p110
      %p112 = scmp.ne.s32.totalorder %s101, %s104
      %p113 = scmp.eq.s32.totalorder %s21, 2
      %p114 = por %p112, %p113
      %p115 = scmp.ne.s32.totalorder %s104, %s105
      %p116 = scmp.eq.s32.totalorder %s21, 0
      %p117 = por %p115, %p116
      %p118 = scmp.ne.s32.totalorder %s104, %s105
      %p119 = scmp.eq.s32.totalorder %s22, 2
      %p120 = por %p118, %p119
      %p122 = scmp.ne.s32.totalorder %s105, %s121
      %p123 = scmp.eq.s32.totalorder %s22, 0
      %p124 = por %p122, %p123
      %s125 = ssub.s32 %s23, %s42
      %s126 = ssub.s32 %s24, %s38
      %s127 = sor.u32 %s125, %s126
      %p128 = scmp.eq.s32.totalorder %s127, 0
      %s130 = sadd.s32 %s129, 1
      %s131 = scalar_select %p128, %s129, %s130
      %p134 = pneg %p128
      %p135 = scmp.eq.s32.totalorder %s16, 2
      %p136 = por %p134, %p135
      %p137 = scmp.ne.s32.totalorder %s129, %s132
      %p138 = scmp.eq.s32.totalorder %s16, 0
      %p139 = por %p137, %p138
      %p140 = scmp.ne.s32.totalorder %s129, %s132
      %p141 = scmp.eq.s32.totalorder %s21, 2
      %p142 = por %p140, %p141
      %p143 = scmp.ne.s32.totalorder %s132, %s133
      %p144 = scmp.eq.s32.totalorder %s21, 0
      %p145 = por %p143, %p144
      %p146 = scmp.ne.s32.totalorder %s132, %s133
      %p147 = scmp.eq.s32.totalorder %s22, 2
      %p148 = por %p146, %p147
      %p150 = scmp.ne.s32.totalorder %s133, %s149
      %p151 = scmp.eq.s32.totalorder %s22, 0
      %p152 = por %p150, %p151
      %p153 = scmp.le.s32.totalorder 1, %s16
      %p154 = scmp.lt.s32.totalorder %s16, 4
      %p155 = pnand %p153, %p154
      %p156 = pneg %p155
      // Predicated region
      $region9: #{tpu_custom_call.1} parent=5 // pred_check
        _
      $region10: #{tpu_custom_call.1} parent=5 // pred_check_branch
        %158 = sbr.rel (%p155) target = $region12
      $region11: #{tpu_custom_call.1} parent=5 // pred_region
        %s159 = ssub.s32 %s16, 1
        // Predicated region
        $region13: #{tpu_custom_call.1} parent=11 // pred_check
          %p160 = pneg %p63
        $region14: #{tpu_custom_call.1} parent=11 // pred_check_branch
          %162 = sbr.rel (%p160) target = $region16
        $region15: #{tpu_custom_call.1} parent=11 // pred_region
          %s163 = smul.u32 16, %s26
          %s165 = ssub.s32 1024, 1024
          %166 = vsyncadd [#allocation4], %s165
          %s167 = sadd.s32 %s28, %s163
          %s168 = smul.addr %s167, 64
          %s169 = scalar_lea.hbm %s0, %s168
          %s170 = sshll.u32 [#allocation3], 4
          %s171 = int_to_ptr.vmem [resolvable:$true] %s170
          %176 = dma.hbm_to_vmem [thread:$0]  %s169, 1024, %s171, [#allocation4], 64, 64, 4
        $region16: #{tpu_custom_call.1} parent=11 // pred_fallthru
          _
      $region12: #{tpu_custom_call.1} parent=5 // pred_fallthru
        _
      %p177 = scmp.lt.s32.totalorder %s16, 3
      // Predicated region
      $region17: #{tpu_custom_call.1} parent=5 // pred_check
        %p178 = pneg %p177
      $region18: #{tpu_custom_call.1} parent=5 // pred_check_branch
        %180 = sbr.rel (%p178) target = $region20
      $region19: #{tpu_custom_call.1} parent=5 // pred_region
        // Predicated region
        $region21: #{tpu_custom_call.1} parent=19 // pred_check
          %p181 = pneg %p85
        $region22: #{tpu_custom_call.1} parent=19 // pred_check_branch
          %183 = sbr.rel (%p181) target = $region24
        $region23: #{tpu_custom_call.1} parent=19 // pred_region
          %s184 = sand.u32 %s75, 1
          %s185 = scalar_lea.sflag [#allocation7], %s184
          %s186 = sand.u32 %s75, 1
          %s187 = smul.addr %s186, 64
          %s188 = scalar_lea.vmem [#allocation6], %s187
          %s189 = smul.u32 16, %s25
          %s191 = ssub.s32 1024, 1024
          %192 = vsyncadd %s185, %s191
          %s193 = smul.addr %s189, 3
          %s194 = sadd.s32 %s24, %s193
          %s195 = smul.addr %s194, 64
          %s196 = scalar_lea.hbm %s1, %s195
          %s197 = sshll.u32 %s188, 4
          %s198 = int_to_ptr.vmem [resolvable:$true] %s197
          %203 = dma.hbm_to_vmem [thread:$0]  %s196, 1024, %s198, %s185, 192, 64, 4
        $region24: #{tpu_custom_call.1} parent=19 // pred_fallthru
          _
        // Predicated region
        $region25: #{tpu_custom_call.1} parent=19 // pred_check
          %p204 = pneg %p111
        $region26: #{tpu_custom_call.1} parent=19 // pred_check_branch
          %206 = sbr.rel (%p204) target = $region28
        $region27: #{tpu_custom_call.1} parent=19 // pred_region
          %p207 = scmp.lt.s32.totalorder %s24, 2
          %s208 = scalar_select %p207, %s24, 2
          %s209 = scalar_lea.vmem %s2, %s208
        $region28: #{tpu_custom_call.1} parent=19 // pred_fallthru
          _
      $region20: #{tpu_custom_call.1} parent=5 // pred_fallthru
        _
      %p210 = scmp.le.s32.totalorder 1, %s16
      %p211 = scmp.lt.s32.totalorder %s16, 4
      %p212 = pnand %p210, %p211
      %p213 = pneg %p212
      // Predicated region
      $region29: #{tpu_custom_call.1} parent=5 // pred_check
        _
      $region30: #{tpu_custom_call.1} parent=5 // pred_check_branch
        %215 = sbr.rel (%p212) target = $region32
      $region31: #{tpu_custom_call.1} parent=5 // pred_region
        %s216 = ssub.s32 %s16, 1
        // Predicated region
        $region33: #{tpu_custom_call.1} parent=31 // pred_check
          %p217 = pneg %p63
        $region34: #{tpu_custom_call.1} parent=31 // pred_check_branch
          %219 = sbr.rel (%p217) target = $region36
        $region35: #{tpu_custom_call.1} parent=31 // pred_region
          %220 = dma.done [#allocation4], 1024
        $region36: #{tpu_custom_call.1} parent=31 // pred_fallthru
          _
        %s221 = sand.u32 %s78, 1
        %s222 = scalar_lea.sflag [#allocation7], %s221
        %s223 = sand.u32 %s78, 1
        %s224 = smul.addr %s223, 64
        %s225 = scalar_lea.vmem [#allocation6], %s224
        // Predicated region
        $region37: #{tpu_custom_call.1} parent=31 // pred_check
          %p226 = pneg %p91
        $region38: #{tpu_custom_call.1} parent=31 // pred_check_branch
          %228 = sbr.rel (%p226) target = $region40
        $region39: #{tpu_custom_call.1} parent=31 // pred_region
          %229 = dma.done %s222, 1024
        $region40: #{tpu_custom_call.1} parent=31 // pred_fallthru
          _
        %p230 = pneg %p63
        %p231 = pneg %p60
        %s232 = sand.u32 %s78, 1
        %s233 = scalar_lea.sflag [#allocation7], %s232
        %s234 = sand.u32 %s78, 1
        %s235 = smul.addr %s234, 64
        %s236 = scalar_lea.vmem [#allocation6], %s235
        %p237 = pneg %p91
        %p238 = pneg %p88
        %p239 = scmp.lt.s32.totalorder %s27, 2
        %s240 = scalar_select %p239, %s27, 2
        %s241 = scalar_lea.vmem %s2, %s240
        %p242 = pneg %p117
        %p243 = pneg %p114
        %p244 = pneg %p145
        %p245 = pneg %p142
        %s246 = sand.u32 %s132, 1
        %s247 = scalar_lea.sflag [#allocation5], %s246
        %s248 = sand.u32 %s132, 1
        %s249 = smul.addr %s248, 128
        %s250 = scalar_lea.vmem [#allocation8], %s249
        %s251 = smul.u32 16, %s26
        %s252 = smul.u32 16, %s28
        %p253 = scmp.lt.s32.totalorder %s27, 2
        %s254 = scalar_select %p253, %s27, 2
        %s255 = scalar_lea.vmem %s2, %s254
        %s256 = smul.u32 16, %s26
        %p258 = scmp.eq.s32.totalorder %s28, 0
        // Predicated region
        $region41: #{tpu_custom_call.1} parent=31 // pred_check
          %p259 = pneg %p258
        $region42: #{tpu_custom_call.1} parent=31 // pred_check_branch
          %261 = sbr.rel (%p259) target = $region44
        $region43: #{tpu_custom_call.1} parent=31 // pred_region
          %262 = vst [vmem:[#allocation2] sm:$0xff] 0.0
          %263 = vst [vmem:[#allocation2 + $0x8] sm:$0xff] 0.0
          %264 = vst [vmem:[#allocation2 + $0x10] sm:$0xff] 0.0
          %265 = vst [vmem:[#allocation2 + $0x18] sm:$0xff] 0.0
          %266 = vst [vmem:[#allocation2 + $0x20] sm:$0xff] 0.0
          %267 = vst [vmem:[#allocation2 + $0x28] sm:$0xff] 0.0
          %268 = vst [vmem:[#allocation2 + $0x30] sm:$0xff] 0.0
          %269 = vst [vmem:[#allocation2 + $0x38] sm:$0xff] 0.0
          %270 = vst [vmem:[#allocation2 + $0x40] sm:$0xff] 0.0
          %271 = vst [vmem:[#allocation2 + $0x48] sm:$0xff] 0.0
          %272 = vst [vmem:[#allocation2 + $0x50] sm:$0xff] 0.0
          %273 = vst [vmem:[#allocation2 + $0x58] sm:$0xff] 0.0
          %274 = vst [vmem:[#allocation2 + $0x60] sm:$0xff] 0.0
          %275 = vst [vmem:[#allocation2 + $0x68] sm:$0xff] 0.0
          %276 = vst [vmem:[#allocation2 + $0x70] sm:$0xff] 0.0
          %277 = vst [vmem:[#allocation2 + $0x78] sm:$0xff] 0.0
        $region44: #{tpu_custom_call.1} parent=31 // pred_fallthru
          _
        %v278 = vld [vmem:[#allocation2] sm:$0xff]
        %v279 = vld [vmem:[#allocation2 + $0x8] sm:$0xff]
        %v280 = vld [vmem:[#allocation2 + $0x10] sm:$0xff]
        %v281 = vld [vmem:[#allocation2 + $0x18] sm:$0xff]
        %v282 = vld [vmem:[#allocation2 + $0x20] sm:$0xff]
        %v283 = vld [vmem:[#allocation2 + $0x28] sm:$0xff]
        %v284 = vld [vmem:[#allocation2 + $0x30] sm:$0xff]
        %v285 = vld [vmem:[#allocation2 + $0x38] sm:$0xff]
        %v286 = vld [vmem:[#allocation2 + $0x40] sm:$0xff]
        %v287 = vld [vmem:[#allocation2 + $0x48] sm:$0xff]
        %v288 = vld [vmem:[#allocation2 + $0x50] sm:$0xff]
        %v289 = vld [vmem:[#allocation2 + $0x58] sm:$0xff]
        %v290 = vld [vmem:[#allocation2 + $0x60] sm:$0xff]
        %v291 = vld [vmem:[#allocation2 + $0x68] sm:$0xff]
        %v292 = vld [vmem:[#allocation2 + $0x70] sm:$0xff]
        %v293 = vld [vmem:[#allocation2 + $0x78] sm:$0xff]
        %v294 = vld [vmem:[#allocation3] sm:$0xf]
        %v295 = vld [vmem:[#allocation3 + $0x4] sm:$0xf]
        %v296 = vld [vmem:[#allocation3 + $0x8] sm:$0xf]
        %v297 = vld [vmem:[#allocation3 + $0xc] sm:$0xf]
        %v298 = vld [vmem:[#allocation3 + $0x10] sm:$0xf]
        %v299 = vld [vmem:[#allocation3 + $0x14] sm:$0xf]
        %v300 = vld [vmem:[#allocation3 + $0x18] sm:$0xf]
        %v301 = vld [vmem:[#allocation3 + $0x1c] sm:$0xf]
        %v302 = vld [vmem:[#allocation3 + $0x20] sm:$0xf]
        %v303 = vld [vmem:[#allocation3 + $0x24] sm:$0xf]
        %v304 = vld [vmem:[#allocation3 + $0x28] sm:$0xf]
        %v305 = vld [vmem:[#allocation3 + $0x2c] sm:$0xf]
        %v306 = vld [vmem:[#allocation3 + $0x30] sm:$0xf]
        %v307 = vld [vmem:[#allocation3 + $0x34] sm:$0xf]
        %v308 = vld [vmem:[#allocation3 + $0x38] sm:$0xf]
        %v309 = vld [vmem:[#allocation3 + $0x3c] sm:$0xf]
        %v310 = vld [vmem:[%s225] sm:$0xf]
        %v311 = vld [vmem:[%s225 + $0x4] sm:$0xf]
        %v312 = vld [vmem:[%s225 + $0x8] sm:$0xf]
        %v313 = vld [vmem:[%s225 + $0xc] sm:$0xf]
        %v314 = vld [vmem:[%s225 + $0x10] sm:$0xf]
        %v315 = vld [vmem:[%s225 + $0x14] sm:$0xf]
        %v316 = vld [vmem:[%s225 + $0x18] sm:$0xf]
        %v317 = vld [vmem:[%s225 + $0x1c] sm:$0xf]
        %v318 = vld [vmem:[%s225 + $0x20] sm:$0xf]
        %v319 = vld [vmem:[%s225 + $0x24] sm:$0xf]
        %v320 = vld [vmem:[%s225 + $0x28] sm:$0xf]
        %v321 = vld [vmem:[%s225 + $0x2c] sm:$0xf]
        %v322 = vld [vmem:[%s225 + $0x30] sm:$0xf]
        %v323 = vld [vmem:[%s225 + $0x34] sm:$0xf]
        %v324 = vld [vmem:[%s225 + $0x38] sm:$0xf]
        %v325 = vld [vmem:[%s225 + $0x3c] sm:$0xf]
        %v342 = vunpack.c.l.b16 %v294
        %v343 = vunpack.c.l.b16 %v295
        %v344 = vunpack.c.l.b16 %v296
        %v345 = vunpack.c.l.b16 %v297
        %v346 = vunpack.c.l.b16 %v298
        %v347 = vunpack.c.l.b16 %v299
        %v348 = vunpack.c.l.b16 %v300
        %v349 = vunpack.c.l.b16 %v301
        %v350 = vunpack.c.l.b16 %v302
        %v351 = vunpack.c.l.b16 %v303
        %v352 = vunpack.c.l.b16 %v304
        %v353 = vunpack.c.l.b16 %v305
        %v354 = vunpack.c.l.b16 %v306
        %v355 = vunpack.c.l.b16 %v307
        %v356 = vunpack.c.l.b16 %v308
        %v357 = vunpack.c.l.b16 %v309
        %v358 = vpack.c.b16 %v343, %v342
        %v359 = vpack.c.b16 %v345, %v344
        %v360 = vpack.c.b16 %v347, %v346
        %v361 = vpack.c.b16 %v349, %v348
        %v362 = vpack.c.b16 %v351, %v350
        %v363 = vpack.c.b16 %v353, %v352
        %v364 = vpack.c.b16 %v355, %v354
        %v365 = vpack.c.b16 %v357, %v356
        %v390 = vunpack.c.l.b16 %v310
        %v391 = vunpack.c.l.b16 %v311
        %v392 = vunpack.c.l.b16 %v312
        %v393 = vunpack.c.l.b16 %v313
        %v394 = vunpack.c.l.b16 %v314
        %v395 = vunpack.c.l.b16 %v315
        %v396 = vunpack.c.l.b16 %v316
        %v397 = vunpack.c.l.b16 %v317
        %v398 = vunpack.c.l.b16 %v318
        %v399 = vunpack.c.l.b16 %v319
        %v400 = vunpack.c.l.b16 %v320
        %v401 = vunpack.c.l.b16 %v321
        %v402 = vunpack.c.l.b16 %v322
        %v403 = vunpack.c.l.b16 %v323
        %v404 = vunpack.c.l.b16 %v324
        %v405 = vunpack.c.l.b16 %v325
        %v406 = vpack.c.b16 %v391, %v390
        %v407 = vpack.c.b16 %v393, %v392
        %v408 = vpack.c.b16 %v395, %v394
        %v409 = vpack.c.b16 %v397, %v396
        %v410 = vpack.c.b16 %v399, %v398
        %v411 = vpack.c.b16 %v401, %v400
        %v412 = vpack.c.b16 %v403, %v402
        %v413 = vpack.c.b16 %v405, %v404
        %422 = vmatprep.subr.bf16.mxu0 0
        %423 = vmatpush1.bf16.msra.mxu0 %v406
        %424 = vmatprep.subr.bf16.mxu0 0
        %425 = vmatpush1.bf16.msra.mxu0 %v407
        %426 = vmatprep.subr.bf16.mxu0 0
        %427 = vmatpush1.bf16.msra.mxu0 %v408
        %428 = vmatprep.subr.bf16.mxu0 0
        %429 = vmatpush1.bf16.msra.mxu0 %v409
        %430 = vmatprep.subr.bf16.mxu0 0
        %431 = vmatpush1.bf16.msra.mxu0 %v410
        %432 = vmatprep.subr.bf16.mxu0 0
        %433 = vmatpush1.bf16.msra.mxu0 %v411
        %434 = vmatprep.subr.bf16.mxu0 0
        %435 = vmatpush1.bf16.msra.mxu0 %v412
        %436 = vmatprep.subr.bf16.mxu0 0
        %437 = vmatpush1.bf16.msra.mxu0 %v413
        %438 = vmatprep.subr.bf16.mxu0 0
        %439 = vmatpush1.bf16.msra.mxu0 0
        %440 = vmatprep.subr.bf16.mxu0 0
        %441 = vmatpush1.bf16.msra.mxu0 0
        %442 = vmatprep.subr.bf16.mxu0 0
        %443 = vmatpush1.bf16.msra.mxu0 0
        %444 = vmatprep.subr.bf16.mxu0 0
        %445 = vmatpush1.bf16.msra.mxu0 0
        %446 = vmatprep.subr.bf16.mxu0 0
        %447 = vmatpush1.bf16.msra.mxu0 0
        %448 = vmatprep.subr.bf16.mxu0 0
        %449 = vmatpush1.bf16.msra.mxu0 0
        %450 = vmatprep.subr.bf16.mxu0 0
        %451 = vmatpush1.bf16.msra.mxu0 0
        %452 = vmatprep.subr.bf16.mxu0 0
        %453 = vmatpush1.bf16.msra.mxu0 0
        %454 = vmatprep.mubr.bf16.mxu0 0
        %455 = vmatmul.mubr.bf16.gmra.mrb[0].mxu0 %v358
        %v456 = vpop.f32.mrb[0].mxu0
        %v457 = vadd.f32 0.0, %v456
        %v458 = vpop.f32.mrb[0].mxu0
        %v459 = vpop.f32.mrb[0].mxu0
        %v460 = vadd.f32 0.0, %v459
        %v461 = vpop.f32.mrb[0].mxu0
        %462 = vmatprep.mubr.bf16.mxu0 0
        %463 = vmatmul.mubr.bf16.gmra.mrb[0].mxu0 %v359
        %v464 = vpop.f32.mrb[0].mxu0
        %v465 = vadd.f32 0.0, %v464
        %v466 = vpop.f32.mrb[0].mxu0
        %v467 = vpop.f32.mrb[0].mxu0
        %v468 = vadd.f32 0.0, %v467
        %v469 = vpop.f32.mrb[0].mxu0
        %470 = vmatprep.mubr.bf16.mxu0 0
        %471 = vmatmul.mubr.bf16.gmra.mrb[0].mxu0 %v360
        %v472 = vpop.f32.mrb[0].mxu0
        %v473 = vadd.f32 0.0, %v472
        %v474 = vpop.f32.mrb[0].mxu0
        %v475 = vpop.f32.mrb[0].mxu0
        %v476 = vadd.f32 0.0, %v475
        %v477 = vpop.f32.mrb[0].mxu0
        %478 = vmatprep.mubr.bf16.mxu0 0
        %479 = vmatmul.mubr.bf16.gmra.mrb[0].mxu0 %v361
        %v480 = vpop.f32.mrb[0].mxu0
        %v481 = vadd.f32 0.0, %v480
        %v482 = vpop.f32.mrb[0].mxu0
        %v483 = vpop.f32.mrb[0].mxu0
        %v484 = vadd.f32 0.0, %v483
        %v485 = vpop.f32.mrb[0].mxu0
        %486 = vmatprep.mubr.bf16.mxu0 0
        %487 = vmatmul.mubr.bf16.gmra.mrb[0].mxu0 %v362
        %v488 = vpop.f32.mrb[0].mxu0
        %v489 = vadd.f32 0.0, %v488
        %v490 = vpop.f32.mrb[0].mxu0
        %v491 = vpop.f32.mrb[0].mxu0
        %v492 = vadd.f32 0.0, %v491
        %v493 = vpop.f32.mrb[0].mxu0
        %494 = vmatprep.mubr.bf16.mxu0 0
        %495 = vmatmul.mubr.bf16.gmra.mrb[0].mxu0 %v363
        %v496 = vpop.f32.mrb[0].mxu0
        %v497 = vadd.f32 0.0, %v496
        %v498 = vpop.f32.mrb[0].mxu0
        %v499 = vpop.f32.mrb[0].mxu0
        %v500 = vadd.f32 0.0, %v499
        %v501 = vpop.f32.mrb[0].mxu0
        %502 = vmatprep.mubr.bf16.mxu0 0
        %503 = vmatmul.mubr.bf16.gmra.mrb[0].mxu0 %v364
        %v504 = vpop.f32.mrb[0].mxu0
        %v505 = vadd.f32 0.0, %v504
        %v506 = vpop.f32.mrb[0].mxu0
        %v507 = vpop.f32.mrb[0].mxu0
        %v508 = vadd.f32 0.0, %v507
        %v509 = vpop.f32.mrb[0].mxu0
        %510 = vmatprep.mubr.bf16.mxu0 0
        %511 = vmatmul.mubr.bf16.gmra.mrb[0].mxu0 %v365
        %v512 = vpop.f32.mrb[0].mxu0
        %v513 = vadd.f32 0.0, %v512
        %v514 = vpop.f32.mrb[0].mxu0
        %v515 = vpop.f32.mrb[0].mxu0
        %v516 = vadd.f32 0.0, %v515
        %v517 = vpop.f32.mrb[0].mxu0
        %518 = vdwg.mxu0
        %v519 = vadd.f32 %v278, %v457
        %v520 = vadd.f32 %v279, %v460
        %v521 = vadd.f32 %v280, %v465
        %v522 = vadd.f32 %v281, %v468
        %v523 = vadd.f32 %v282, %v473
        %v524 = vadd.f32 %v283, %v476
        %v525 = vadd.f32 %v284, %v481
        %v526 = vadd.f32 %v285, %v484
        %v527 = vadd.f32 %v286, %v489
        %v528 = vadd.f32 %v287, %v492
        %v529 = vadd.f32 %v288, %v497
        %v530 = vadd.f32 %v289, %v500
        %v531 = vadd.f32 %v290, %v505
        %v532 = vadd.f32 %v291, %v508
        %v533 = vadd.f32 %v292, %v513
        %v534 = vadd.f32 %v293, %v516
        %535 = vst [vmem:[#allocation2] sm:$0xff] %v519
        %536 = vst [vmem:[#allocation2 + $0x8] sm:$0xff] %v520
        %537 = vst [vmem:[#allocation2 + $0x10] sm:$0xff] %v521
        %538 = vst [vmem:[#allocation2 + $0x18] sm:$0xff] %v522
        %539 = vst [vmem:[#allocation2 + $0x20] sm:$0xff] %v523
        %540 = vst [vmem:[#allocation2 + $0x28] sm:$0xff] %v524
        %541 = vst [vmem:[#allocation2 + $0x30] sm:$0xff] %v525
        %542 = vst [vmem:[#allocation2 + $0x38] sm:$0xff] %v526
        %543 = vst [vmem:[#allocation2 + $0x40] sm:$0xff] %v527
        %544 = vst [vmem:[#allocation2 + $0x48] sm:$0xff] %v528
        %545 = vst [vmem:[#allocation2 + $0x50] sm:$0xff] %v529
        %546 = vst [vmem:[#allocation2 + $0x58] sm:$0xff] %v530
        %547 = vst [vmem:[#allocation2 + $0x60] sm:$0xff] %v531
        %548 = vst [vmem:[#allocation2 + $0x68] sm:$0xff] %v532
        %549 = vst [vmem:[#allocation2 + $0x70] sm:$0xff] %v533
        %550 = vst [vmem:[#allocation2 + $0x78] sm:$0xff] %v534
        // Predicated region
        $region45: #{tpu_custom_call.1} parent=31 // pred_check
          %p551 = pneg %p258
        $region46: #{tpu_custom_call.1} parent=31 // pred_check_branch
          %553 = sbr.rel (%p551) target = $region48
        $region47: #{tpu_custom_call.1} parent=31 // pred_region
          %v554 = vld [vmem:[#allocation2] sm:$0xff]
          %v555 = vld [vmem:[#allocation2 + $0x8] sm:$0xff]
          %v556 = vld [vmem:[#allocation2 + $0x10] sm:$0xff]
          %v557 = vld [vmem:[#allocation2 + $0x18] sm:$0xff]
          %v558 = vld [vmem:[#allocation2 + $0x20] sm:$0xff]
          %v559 = vld [vmem:[#allocation2 + $0x28] sm:$0xff]
          %v560 = vld [vmem:[#allocation2 + $0x30] sm:$0xff]
          %v561 = vld [vmem:[#allocation2 + $0x38] sm:$0xff]
          %v562 = vld [vmem:[#allocation2 + $0x40] sm:$0xff]
          %v563 = vld [vmem:[#allocation2 + $0x48] sm:$0xff]
          %v564 = vld [vmem:[#allocation2 + $0x50] sm:$0xff]
          %v565 = vld [vmem:[#allocation2 + $0x58] sm:$0xff]
          %v566 = vld [vmem:[#allocation2 + $0x60] sm:$0xff]
          %v567 = vld [vmem:[#allocation2 + $0x68] sm:$0xff]
          %v568 = vld [vmem:[#allocation2 + $0x70] sm:$0xff]
          %v569 = vld [vmem:[#allocation2 + $0x78] sm:$0xff]
          %v570 = vld [vmem:[%s255] sm:$0x1]
          %v572 = vlaneseq
          %v573 = vshrl.u32 %v572, 7
          %v574 = vsub.s32 0, %v573
          %v575 = vrot.slane %v570, %v574
          %v577 = vadd.f32 %v554, %v575
          %v578 = vadd.f32 %v555, %v575
          %v579 = vadd.f32 %v556, %v575
          %v580 = vadd.f32 %v557, %v575
          %v581 = vadd.f32 %v558, %v575
          %v582 = vadd.f32 %v559, %v575
          %v583 = vadd.f32 %v560, %v575
          %v584 = vadd.f32 %v561, %v575
          %v585 = vadd.f32 %v562, %v575
          %v586 = vadd.f32 %v563, %v575
          %v587 = vadd.f32 %v564, %v575
          %v588 = vadd.f32 %v565, %v575
          %v589 = vadd.f32 %v566, %v575
          %v590 = vadd.f32 %v567, %v575
          %v591 = vadd.f32 %v568, %v575
          %v592 = vadd.f32 %v569, %v575
          %v593 = vmax.f32 %v577, 0.0
          %v594 = vmax.f32 %v578, 0.0
          %v595 = vmax.f32 %v579, 0.0
          %v596 = vmax.f32 %v580, 0.0
          %v597 = vmax.f32 %v581, 0.0
          %v598 = vmax.f32 %v582, 0.0
          %v599 = vmax.f32 %v583, 0.0
          %v600 = vmax.f32 %v584, 0.0
          %v601 = vmax.f32 %v585, 0.0
          %v602 = vmax.f32 %v586, 0.0
          %v603 = vmax.f32 %v587, 0.0
          %v604 = vmax.f32 %v588, 0.0
          %v605 = vmax.f32 %v589, 0.0
          %v606 = vmax.f32 %v590, 0.0
          %v607 = vmax.f32 %v591, 0.0
          %v608 = vmax.f32 %v592, 0.0
          %609 = vst [vmem:[%s250] sm:$0xff] %v593
          %610 = vst [vmem:[%s250 + $0x8] sm:$0xff] %v594
          %611 = vst [vmem:[%s250 + $0x10] sm:$0xff] %v595
          %612 = vst [vmem:[%s250 + $0x18] sm:$0xff] %v596
          %613 = vst [vmem:[%s250 + $0x20] sm:$0xff] %v597
          %614 = vst [vmem:[%s250 + $0x28] sm:$0xff] %v598
          %615 = vst [vmem:[%s250 + $0x30] sm:$0xff] %v599
          %616 = vst [vmem:[%s250 + $0x38] sm:$0xff] %v600
          %617 = vst [vmem:[%s250 + $0x40] sm:$0xff] %v601
          %618 = vst [vmem:[%s250 + $0x48] sm:$0xff] %v602
          %619 = vst [vmem:[%s250 + $0x50] sm:$0xff] %v603
          %620 = vst [vmem:[%s250 + $0x58] sm:$0xff] %v604
          %621 = vst [vmem:[%s250 + $0x60] sm:$0xff] %v605
          %622 = vst [vmem:[%s250 + $0x68] sm:$0xff] %v606
          %623 = vst [vmem:[%s250 + $0x70] sm:$0xff] %v607
          %624 = vst [vmem:[%s250 + $0x78] sm:$0xff] %v608
        $region48: #{tpu_custom_call.1} parent=31 // pred_fallthru
          _
        %s625 = sand.u32 %s132, 1
        %s626 = scalar_lea.sflag [#allocation5], %s625
        %s627 = sand.u32 %s132, 1
        %s628 = smul.addr %s627, 128
        %s629 = scalar_lea.vmem [#allocation8], %s628
        // Predicated region
        $region49: #{tpu_custom_call.1} parent=31 // pred_check
          %p630 = pneg %p142
        $region50: #{tpu_custom_call.1} parent=31 // pred_check_branch
          %632 = sbr.rel (%p630) target = $region52
        $region51: #{tpu_custom_call.1} parent=31 // pred_region
          %s633 = smul.u32 16, %s26
          %s635 = ssub.s32 2048, 2048
          %636 = vsyncadd %s626, %s635
          %s637 = smul.addr %s633, 3
          %s638 = sadd.s32 %s27, %s637
          %s639 = smul.addr %s638, 128
          %s640 = scalar_lea.hbm %s3, %s639
          %s641 = sshll.u32 %s629, 4
          %s642 = int_to_ptr.vmem [resolvable:$true] %s641
          %647 = dma.vmem_to_hbm [thread:$0]  %s642, 2048, %s640, %s626, 128, 384, 8
        $region52: #{tpu_custom_call.1} parent=31 // pred_fallthru
          _
      $region32: #{tpu_custom_call.1} parent=5 // pred_fallthru
        _
      %p648 = scmp.le.s32.totalorder 2, %s16
      // Predicated region
      $region53: #{tpu_custom_call.1} parent=5 // pred_check
        %p649 = pneg %p648
      $region54: #{tpu_custom_call.1} parent=5 // pred_check_branch
        %651 = sbr.rel (%p649) target = $region56
      $region55: #{tpu_custom_call.1} parent=5 // pred_region
        %s652 = ssub.s32 %s16, 2
        // Predicated region
        $region57: #{tpu_custom_call.1} parent=55 // pred_check
          %p653 = pneg %p148
        $region58: #{tpu_custom_call.1} parent=55 // pred_check_branch
          %655 = sbr.rel (%p653) target = $region60
        $region59: #{tpu_custom_call.1} parent=55 // pred_region
          %s656 = sand.u32 %s133, 1
          %s657 = scalar_lea.sflag [#allocation5], %s656
          %s658 = sand.u32 %s133, 1
          %s659 = smul.addr %s658, 128
          %s660 = scalar_lea.vmem [#allocation8], %s659
          %661 = dma.done %s657, 2048
        $region60: #{tpu_custom_call.1} parent=55 // pred_fallthru
          _
      $region56: #{tpu_custom_call.1} parent=5 // pred_fallthru
        _
    $region6: #{tpu_custom_call.1} parent=1 // loop_footer
      %s20 = sadd.s32 1, %s16
    $region7: #{tpu_custom_call.1} parent=1 // loop_footer_branch
      %15 = sbr.rel target = $region3
    $region8: #{tpu_custom_call.1} parent=1 // loop_exit
      _
    %662 = vsyncpa [#allocation4], 1
    %s663 = scalar_lea.sflag [#allocation4], 1
    %664 = vsyncpa %s663, 1
    %665 = vsyncpa [#allocation7], 1
    %s666 = scalar_lea.sflag [#allocation7], 1
    %667 = vsyncpa %s666, 1
    %668 = vsyncpa [#allocation5], 1
    %s669 = scalar_lea.sflag [#allocation5], 1
    %670 = vsyncpa %s669, 1

</llo_original>
